<compile_context>
chip_gen: v7x
topology: tpu7x:2x2x1
jax: 0.10.0
libtpu: 0.0.40
codegen_flags: <defaults>
</compile_context>

<pallas_src>
import jax
import jax.numpy as jnp
from jax.experimental import pallas as pl
from jax.experimental.pallas import tpu as pltpu

LEAKY_SLOPE = 0.01   # nn.LeakyReLU default
BN_EPS = 1e-5        # nn.BatchNorm1d default
LANE = 128
SUBLANE = 8


def _round_up(x, m):
    return (x + m - 1) // m * m


def _pad2d(x, rows, cols):
    return jnp.pad(x, ((0, rows - x.shape[0]), (0, cols - x.shape[1])))


# --------------------------------------------------------------------------
# Kernel 1: GraphConv
#   h = relu( in_norm * ((A @ (X * out_norm)) @ Wc) + bc )
# Grid = (row_tiles "parallel", k_steps "arbitrary").  k walks a scalar-
# prefetched table of nonzero k-tile indices; padded tail entries repeat the
# last valid tile (no re-DMA) and the dot is skipped with pl.when.
# A is int8 in HBM, cast to bf16 just before the MXU; accumulation is f32.
# --------------------------------------------------------------------------
def graph_conv_kernel(ktbl_ref, cnt_ref, a_ref, xs_ref, innorm_ref, wc_ref,
                      bc_ref, h_ref, acc_ref):
    i = pl.program_id(0)
    k = pl.program_id(1)

    @pl.when(k == 0)
    def _():
        acc_ref[...] = jnp.zeros_like(acc_ref)

    @pl.when(k < cnt_ref[i])             # skip MXU work on zero / padded tiles
    def _():
        a = a_ref[...].astype(jnp.bfloat16)          # int8 (HBM) -> bf16 (MXU)
        acc_ref[...] += jnp.dot(a, xs_ref[...],
                                preferred_element_type=jnp.float32)

    @pl.when(k == pl.num_programs(1) - 1)
    def _():
        h = jnp.dot(acc_ref[...].astype(jnp.bfloat16), wc_ref[...],
                    preferred_element_type=jnp.float32)
        h = h * innorm_ref[...] + bc_ref[...]        # per-dst D_in^{-1/2}, bias
        h_ref[...] = jnp.maximum(h, 0.0).astype(h_ref.dtype)   # relu -> bf16


# --------------------------------------------------------------------------
# Kernel 2: AvgPooling (P @ H accumulated over node tiles) + relu + MLP tail
# with eval-mode BatchNorm folded into the Linear weights.
# Grid = (node_tiles "arbitrary"); pooled lives in a (Bp, Dp) f32 scratch;
# the MLP tail runs once at the last grid step.
# --------------------------------------------------------------------------
def pool_mlp_kernel(p_ref, h_ref, w1_ref, b1_ref, w2_ref, b2_ref, out_ref,
                    pool_acc):
    j = pl.program_id(0)

    @pl.when(j == 0)
    def _():
        pool_acc[...] = jnp.zeros_like(pool_acc)

    pool_acc[...] += jnp.dot(p_ref[...], h_ref[...].astype(jnp.float32),
                             preferred_element_type=jnp.float32)

    @pl.when(j == pl.num_programs(0) - 1)
    def _():
        pooled = jnp.maximum(pool_acc[...], 0.0)                 # relu
        z1 = jnp.dot(pooled, w1_ref[...],
                     preferred_element_type=jnp.float32) + b1_ref[...]
        z1 = jnp.where(z1 > 0, z1, LEAKY_SLOPE * z1)             # LeakyReLU
        z2 = jnp.dot(z1, w2_ref[...],
                     preferred_element_type=jnp.float32) + b2_ref[...]
        z2 = jnp.where(z2 > 0, z2, LEAKY_SLOPE * z2)             # LeakyReLU
        out_ref[...] = z2.astype(out_ref.dtype)


def gcn_encoder(A, X, P, params, *, tile_m=1024, tile_k=1024):
    """Forward pass. A[dst, src] dense adjacency, X node features, P avg-pool matrix."""
    N = A.shape[0]
    B = P.shape[0]
    Fin = X.shape[1]
    Dc = params["wc"].shape[1]      # GraphConv output dim == module output_dim
    E = params["w1"].shape[1]       # emb_dim

    # ---- cheap wrapper-side prep (XLA) ----
    out_deg = jnp.sum(A, axis=0)                              # (N,) src out-degree
    in_deg = jnp.sum(A, axis=1)                               # (N,) dst in-degree
    out_norm = jax.lax.rsqrt(jnp.maximum(out_deg, 1.0))
    in_norm = jax.lax.rsqrt(jnp.maximum(in_deg, 1.0))
    Xs = X * out_norm[:, None]                                # fold src norm into X

    # fold eval-mode BatchNorm into the Linear layers (exact)
    s1 = params["g1"] * jax.lax.rsqrt(params["v1"] + BN_EPS)
    w1f = params["w1"] * s1
    b1f = (params["b1"] - params["m1"]) * s1 + params["be1"]
    s2 = params["g2"] * jax.lax.rsqrt(params["v2"] + BN_EPS)
    w2f = params["w2"] * s2
    b2f = (params["b2"] - params["m2"]) * s2 + params["be2"]

    # ---- padding / tiling ----
    Nr_min = _round_up(N, LANE)
    tile_m = max(LANE, min(_round_up(tile_m, LANE), Nr_min))
    if Nr_min >= 2 * LANE:            # >=2 row tiles so both v7x TCs get work
        tile_m = min(tile_m, max(LANE, (Nr_min // 2) // LANE * LANE))
    tile_k = max(LANE, min(_round_up(tile_k, LANE), Nr_min))
    Nr = _round_up(N, tile_m)         # padded destination-node count
    Nc = _round_up(N, tile_k)         # padded source-node count
    Fp = _round_up(Fin, LANE)
    Dp = _round_up(Dc, LANE)
    Ep = _round_up(E, LANE)
    Bp = _round_up(B, SUBLANE)
    nri = Nr // tile_m
    nki = Nc // tile_k

    A_pad = _pad2d(A, Nr, Nc)
    A_i8 = A_pad.astype(jnp.int8)                             # 0/1 exact in int8
    Xs_p = _pad2d(Xs, Nc, Fp).astype(jnp.bfloat16)
    innorm_p = _pad2d(in_norm[:, None], Nr, 1).astype(jnp.float32)
    wc_p = _pad2d(params["wc"], Fp, Dp).astype(jnp.bfloat16)  # bf16 epilogue
    bc_p = _pad2d(params["bc"], 1, Dp).astype(jnp.float32)

    # ---- nonzero-tile table (block-diagonal / sparse skipping) ----
    nz = (A_pad.reshape(nri, tile_m, nki, tile_k).sum(axis=(1, 3)) > 0
          ).astype(jnp.int32)                                 # (nri, nki)
    cnt = jnp.sum(nz, axis=1).astype(jnp.int32)               # (nri,)
    order = jnp.argsort(-nz, axis=1).astype(jnp.int32)        # nonzero k-tiles first
    last_valid = order[jnp.arange(nri), jnp.maximum(cnt - 1, 0)]
    j_idx = jnp.arange(nki, dtype=jnp.int32)[None, :]
    k_tbl = jnp.where(j_idx < cnt[:, None], order, last_valid[:, None])
    k_tbl_flat = k_tbl.reshape(-1).astype(jnp.int32)          # flat SMEM-friendly

    def a_map(i, k, ktbl, cnt_):
        return (i, ktbl[i * nki + k])

    def xs_map(i, k, ktbl, cnt_):
        return (ktbl[i * nki + k], 0)

    def innorm_map(i, k, ktbl, cnt_):
        return (i, 0)

    def const_map(i, k, ktbl, cnt_):
        return (0, 0)

    def out_map(i, k, ktbl, cnt_):
        return (i, 0)

    # dense upper-bound estimates (advisory scheduler hint only)
    flops = 2.0 * Nr * Nc * Fp + 2.0 * Nr * Fp * Dp
    bytes_accessed = (Nr * Nc * 1 + Nc * Fp * 2 * nri + Nr * Dp * 2
                      + Fp * Dp * 2 + Dp * 4)

    h = pl.pallas_call(
        graph_conv_kernel,
        out_shape=jax.ShapeDtypeStruct((Nr, Dp), jnp.bfloat16),
        grid_spec=pltpu.PrefetchScalarGridSpec(
            num_scalar_prefetch=2,
            grid=(nri, nki),
            in_specs=[
                pl.BlockSpec((tile_m, tile_k), a_map),        # A tile (int8)
                pl.BlockSpec((tile_k, Fp), xs_map),           # Xs tile (bf16)
                pl.BlockSpec((tile_m, 1), innorm_map),        # in_norm rows
                pl.BlockSpec((Fp, Dp), const_map),            # Wc (resident)
                pl.BlockSpec((1, Dp), const_map),             # bc (resident)
            ],
            out_specs=pl.BlockSpec((tile_m, Dp), out_map),
            scratch_shapes=[pltpu.VMEM((tile_m, Fp), jnp.float32)],
        ),
        compiler_params=pltpu.CompilerParams(
            dimension_semantics=("parallel", "arbitrary"),
            vmem_limit_bytes=48 * 1024 * 1024,
        ),
        cost_estimate=pl.CostEstimate(
            flops=int(flops), transcendentals=0,
            bytes_accessed=int(bytes_accessed)),
    )(k_tbl_flat, cnt, A_i8, Xs_p, innorm_p, wc_p, bc_p)

    # ---- pooling + MLP tail, tiled over node tiles ----
    tile_p = tile_m                   # divides Nr exactly, 128-multiple
    np_tiles = Nr // tile_p
    P_p = _pad2d(P, Bp, Nr).astype(jnp.float32)   # zero cols mask padded h rows
    w1_p = _pad2d(w1f, Dp, Ep).astype(jnp.float32)
    b1_p = _pad2d(b1f, 1, Ep).astype(jnp.float32)
    w2_p = _pad2d(w2f, Ep, Dp).astype(jnp.float32)
    b2_p = _pad2d(b2f, 1, Dp).astype(jnp.float32)

    out_p = pl.pallas_call(
        pool_mlp_kernel,
        out_shape=jax.ShapeDtypeStruct((Bp, Dp), jnp.float32),
        grid_spec=pltpu.PrefetchScalarGridSpec(
            num_scalar_prefetch=0,
            grid=(np_tiles,),
            in_specs=[
                pl.BlockSpec((Bp, tile_p), lambda j: (0, j)),   # P tile
                pl.BlockSpec((tile_p, Dp), lambda j: (j, 0)),   # h tile (bf16)
                pl.BlockSpec((Dp, Ep), lambda j: (0, 0)),
                pl.BlockSpec((1, Ep), lambda j: (0, 0)),
                pl.BlockSpec((Ep, Dp), lambda j: (0, 0)),
                pl.BlockSpec((1, Dp), lambda j: (0, 0)),
            ],
            out_specs=pl.BlockSpec((Bp, Dp), lambda j: (0, 0)),
            scratch_shapes=[pltpu.VMEM((Bp, Dp), jnp.float32)],
        ),
        compiler_params=pltpu.CompilerParams(
            dimension_semantics=("arbitrary",),
            vmem_limit_bytes=32 * 1024 * 1024,
        ),
    )(P_p, h, w1_p, b1_p, w2_p, b2_p)

    return out_p[:B, :Dc]


def init_params(key, input_dim, emb_dim, output_dim):
    ks = jax.random.split(key, 12)
    f32 = jnp.float32
    row = lambda x: x.reshape(1, -1)
    return {
        # GraphConv weight/bias
        "wc": jax.random.normal(ks[0], (input_dim, output_dim), f32) * 0.1,
        "bc": row(jax.random.normal(ks[1], (output_dim,), f32) * 0.05),
        # layer1: Linear(output_dim, emb_dim) + BN(emb_dim)
        "w1": jax.random.normal(ks[2], (output_dim, emb_dim), f32) * 0.1,
        "b1": row(jax.random.normal(ks[3], (emb_dim,), f32) * 0.05),
        "g1": row(1.0 + 0.1 * jax.random.normal(ks[4], (emb_dim,), f32)),
        "be1": row(0.05 * jax.random.normal(ks[5], (emb_dim,), f32)),
        "m1": row(0.1 * jax.random.normal(ks[6], (emb_dim,), f32)),
        "v1": row(1.0 + 0.1 * jax.random.uniform(ks[7], (emb_dim,), f32)),
        # layer2: Linear(emb_dim, output_dim) + BN(output_dim)
        "w2": jax.random.normal(ks[8], (emb_dim, output_dim), f32) * 0.1,
        "b2": row(jax.random.normal(ks[9], (output_dim,), f32) * 0.05),
        "g2": row(1.0 + 0.1 * jax.random.normal(ks[10], (output_dim,), f32)),
        "be2": row(0.05 * jax.random.normal(ks[11], (output_dim,), f32)),
        "m2": row(jnp.zeros((output_dim,), f32)),
        "v2": row(jnp.ones((output_dim,), f32)),
    }


def _reference(A, X, P, params):
    """Pure-JAX forward (f32) for correctness checking."""
    out_norm = jax.lax.rsqrt(jnp.maximum(jnp.sum(A, axis=0), 1.0))
    in_norm = jax.lax.rsqrt(jnp.maximum(jnp.sum(A, axis=1), 1.0))
    agg = (A @ (X * out_norm[:, None])) * in_norm[:, None]
    h = jnp.maximum(agg @ params["wc"] + params["bc"], 0.0)
    pooled = jnp.maximum(P @ h, 0.0)
    z1 = pooled @ params["w1"] + params["b1"]
    z1 = (z1 - params["m1"]) * jax.lax.rsqrt(params["v1"] + BN_EPS) * params["g1"] + params["be1"]
    z1 = jnp.where(z1 > 0, z1, LEAKY_SLOPE * z1)
    z2 = z1 @ params["w2"] + params["b2"]
    z2 = (z2 - params["m2"]) * jax.lax.rsqrt(params["v2"] + BN_EPS) * params["g2"] + params["be2"]
    return jnp.where(z2 > 0, z2, LEAKY_SLOPE * z2)


if __name__ == "__main__":
    # Small synthetic batched graph: B graphs x nodes_per_graph nodes each.
    input_dim, hidden_dim, emb_dim, output_dim = 16, 64, 32, 16  # hidden_dim unused by forward
    B, nodes_per_graph = 4, 96
    N = B * nodes_per_graph

    key = jax.random.PRNGKey(0)
    k_feat, k_adj, k_par = jax.random.split(key, 3)

    # Node features.
    X = jax.random.normal(k_feat, (N, input_dim), jnp.float32)

    # Block-diagonal random adjacency (edges only within each graph), A[dst, src].
    rand_adj = (jax.random.uniform(k_adj, (N, N)) < 0.3).astype(jnp.float32)
    graph_id = jnp.arange(N) // nodes_per_graph
    block_mask = (graph_id[:, None] == graph_id[None, :]).astype(jnp.float32)
    A = rand_adj * block_mask

    # Average-pool matrix: P[g, n] = 1/nodes_per_graph if node n belongs to graph g.
    P = (graph_id[None, :] == jnp.arange(B)[:, None]).astype(jnp.float32) / nodes_per_graph

    params = init_params(k_par, input_dim, emb_dim, output_dim)

    # tile_m=128 / tile_k=128 -> 3x3 tile grid with genuinely skipped zero
    # blocks (block-diagonal graphs), so the sparse/compacted path is exercised.
    out = gcn_encoder(A, X, P, params, tile_m=128, tile_k=128)
    out = jax.block_until_ready(out)

    assert out.shape == (B, output_dim) and out.dtype == jnp.float32
    assert bool(jnp.all(jnp.isfinite(out)))

    ref = _reference(A, X, P, params)
    assert bool(jnp.allclose(out, ref, rtol=5e-2, atol=5e-2))

    print("KERNEL_OK")
</pallas_src>

<mosaic_0001>
module attributes {stable_mosaic.version = 11 : i64} {
  func.func @graph_conv_kernel(%arg0: i32, %arg1: i32, %arg2: memref<9xi32, #tpu.memory_space<smem>>, %arg3: memref<3xi32, #tpu.memory_space<smem>>, %arg4: memref<128x128xi8, #tpu.memory_space<vmem>>, %arg5: memref<128x128xbf16, #tpu.memory_space<vmem>>, %arg6: memref<128x1xf32, #tpu.memory_space<vmem>>, %arg7: memref<128x128xbf16, #tpu.memory_space<vmem>>, %arg8: memref<1x128xf32, #tpu.memory_space<vmem>>, %arg9: memref<128x128xbf16, #tpu.memory_space<vmem>>, %arg10: memref<128x128xf32, #tpu.memory_space<vmem>>) attributes {dimension_semantics = [#tpu.dimension_semantics<parallel>, #tpu.dimension_semantics<arbitrary>], iteration_bounds = array<i64: 3, 3>, scalar_prefetch = 2 : i64, scratch_operands = 1 : i64, tpu.core_type = #tpu.core_type<tc>, window_params = [{transform_indices = @transform_0, window_bounds = array<i64: 128, 128>}, {transform_indices = @transform_1, window_bounds = array<i64: 128, 128>}, {transform_indices = @transform_2, window_bounds = array<i64: 128, 1>}, {pipeline_mode = #tpu.pipeline_mode<synchronous>, transform_indices = @transform_3, window_bounds = array<i64: 128, 128>}, {pipeline_mode = #tpu.pipeline_mode<synchronous>, transform_indices = @transform_4, window_bounds = array<i64: 1, 128>}, {transform_indices = @transform_5, window_bounds = array<i64: 128, 128>}]} {
    %c0_i32 = arith.constant 0 : i32
    %0 = arith.cmpi eq, %arg1, %c0_i32 : i32
    %1 = arith.extui %0 : i1 to i32
    %c0_i32_0 = arith.constant 0 : i32
    %2 = arith.cmpi ne, %1, %c0_i32_0 : i32
    scf.if %2 {
      %cst = arith.constant 0.000000e+00 : f32
      %11 = vector.broadcast %cst : f32 to vector<128x128xf32>
      %c0 = arith.constant 0 : index
      %c0_3 = arith.constant 0 : index
      %12 = vector.load %arg10[%c0, %c0_3] : memref<128x128xf32, #tpu.memory_space<vmem>>, vector<128x128xf32>
      tpu.vector_store %arg10[%c0, %c0_3], %11 {strides = array<i32>} : memref<128x128xf32, #tpu.memory_space<vmem>>, vector<128x128xf32>,
    } else {
    }
    %3 = arith.index_cast %arg0 : i32 to index
    %4 = memref.load %arg3[%3] : memref<3xi32, #tpu.memory_space<smem>>
    %5 = arith.cmpi slt, %arg1, %4 : i32
    %6 = arith.extui %5 : i1 to i32
    %c0_i32_1 = arith.constant 0 : i32
    %7 = arith.cmpi ne, %6, %c0_i32_1 : i32
    scf.if %7 {
      %c0 = arith.constant 0 : index
      %c0_3 = arith.constant 0 : index
      %11 = vector.load %arg4[%c0, %c0_3] : memref<128x128xi8, #tpu.memory_space<vmem>>, vector<128x128xi8>
      %12 = arith.sitofp %11 : vector<128x128xi8> to vector<128x128xbf16>
      %c0_4 = arith.constant 0 : index
      %c0_5 = arith.constant 0 : index
      %13 = vector.load %arg10[%c0_4, %c0_5] : memref<128x128xf32, #tpu.memory_space<vmem>>, vector<128x128xf32>
      %c0_6 = arith.constant 0 : index
      %c0_7 = arith.constant 0 : index
      %14 = vector.load %arg5[%c0_6, %c0_7] : memref<128x128xbf16, #tpu.memory_space<vmem>>, vector<128x128xbf16>
      %cst = arith.constant dense<0.000000e+00> : vector<128x128xf32>
      %15 = tpu.matmul %12, %14, %cst {dimension_numbers = #tpu.dot_dimension_numbers<[1], [0], [0], [1], [0, 0, 1, 1], [], []>} : vector<128x128xbf16>, vector<128x128xbf16>, vector<128x128xf32> -> vector<128x128xf32>
      %16 = arith.addf %13, %15 : vector<128x128xf32>
      %c0_8 = arith.constant 0 : index
      %c0_9 = arith.constant 0 : index
      %17 = vector.load %arg10[%c0_8, %c0_9] : memref<128x128xf32, #tpu.memory_space<vmem>>, vector<128x128xf32>
      tpu.vector_store %arg10[%c0_8, %c0_9], %16 {strides = array<i32>} : memref<128x128xf32, #tpu.memory_space<vmem>>, vector<128x128xf32>,
    } else {
    }
    %c2_i32 = arith.constant 2 : i32
    %8 = arith.cmpi eq, %arg1, %c2_i32 : i32
    %9 = arith.extui %8 : i1 to i32
    %c0_i32_2 = arith.constant 0 : i32
    %10 = arith.cmpi ne, %9, %c0_i32_2 : i32
    scf.if %10 {
      %c0 = arith.constant 0 : index
      %c0_3 = arith.constant 0 : index
      %11 = vector.load %arg10[%c0, %c0_3] : memref<128x128xf32, #tpu.memory_space<vmem>>, vector<128x128xf32>
      %12 = arith.truncf %11 : vector<128x128xf32> to vector<128x128xbf16>
      %c0_4 = arith.constant 0 : index
      %c0_5 = arith.constant 0 : index
      %13 = vector.load %arg7[%c0_4, %c0_5] : memref<128x128xbf16, #tpu.memory_space<vmem>>, vector<128x128xbf16>
      %cst = arith.constant dense<0.000000e+00> : vector<128x128xf32>
      %14 = tpu.matmul %12, %13, %cst {dimension_numbers = #tpu.dot_dimension_numbers<[1], [0], [0], [1], [0, 0, 1, 1], [], []>} : vector<128x128xbf16>, vector<128x128xbf16>, vector<128x128xf32> -> vector<128x128xf32>
      %c0_6 = arith.constant 0 : index
      %c0_7 = arith.constant 0 : index
      %15 = vector.load %arg6[%c0_6, %c0_7] : memref<128x1xf32, #tpu.memory_space<vmem>>, vector<128x1xf32>
      %16 = vector.broadcast %15 : vector<128x1xf32> to vector<128x128xf32>
      %17 = arith.mulf %14, %16 : vector<128x128xf32>
      %c0_8 = arith.constant 0 : index
      %c0_9 = arith.constant 0 : index
      %18 = vector.load %arg8[%c0_8, %c0_9] : memref<1x128xf32, #tpu.memory_space<vmem>>, vector<1x128xf32>
      %19 = vector.broadcast %18 : vector<1x128xf32> to vector<128x128xf32>
      %20 = arith.addf %17, %19 : vector<128x128xf32>
      %cst_10 = arith.constant 0.000000e+00 : f32
      %21 = vector.broadcast %cst_10 : f32 to vector<128x128xf32>
      %22 = arith.maximumf %20, %21 : vector<128x128xf32>
      %23 = arith.truncf %22 : vector<128x128xf32> to vector<128x128xbf16>
      %c0_11 = arith.constant 0 : index
      %c0_12 = arith.constant 0 : index
      %24 = vector.load %arg9[%c0_11, %c0_12] : memref<128x128xbf16, #tpu.memory_space<vmem>>, vector<128x128xbf16>
      tpu.vector_store %arg9[%c0_11, %c0_12], %23 {strides = array<i32>} : memref<128x128xbf16, #tpu.memory_space<vmem>>, vector<128x128xbf16>,
    } else {
    }
    return
  }
  func.func @transform_0(%arg0: i32, %arg1: i32, %arg2: memref<9xi32, #tpu.memory_space<smem>>, %arg3: memref<3xi32, #tpu.memory_space<smem>>) -> (i32, i32) {
    %c3_i32 = arith.constant 3 : i32
    %0 = arith.muli %arg0, %c3_i32 : i32
    %1 = arith.addi %0, %arg1 : i32
    %2 = arith.index_cast %1 : i32 to index
    %3 = memref.load %arg2[%2] : memref<9xi32, #tpu.memory_space<smem>>
    %c0_i32 = arith.constant 0 : i32
    return %arg0, %3 : i32, i32
  }
  func.func @transform_1(%arg0: i32, %arg1: i32, %arg2: memref<9xi32, #tpu.memory_space<smem>>, %arg3: memref<3xi32, #tpu.memory_space<smem>>) -> (i32, i32) {
    %c3_i32 = arith.constant 3 : i32
    %0 = arith.muli %arg0, %c3_i32 : i32
    %1 = arith.addi %0, %arg1 : i32
    %2 = arith.index_cast %1 : i32 to index
    %3 = memref.load %arg2[%2] : memref<9xi32, #tpu.memory_space<smem>>
    %c0_i32 = arith.constant 0 : i32
    %c0_i32_0 = arith.constant 0 : i32
    return %3, %c0_i32 : i32, i32
  }
  func.func @transform_2(%arg0: i32, %arg1: i32, %arg2: memref<9xi32, #tpu.memory_space<smem>>, %arg3: memref<3xi32, #tpu.memory_space<smem>>) -> (i32, i32) {
    %c0_i32 = arith.constant 0 : i32
    %c0_i32_0 = arith.constant 0 : i32
    return %arg0, %c0_i32 : i32, i32
  }
  func.func @transform_3(%arg0: i32, %arg1: i32, %arg2: memref<9xi32, #tpu.memory_space<smem>>, %arg3: memref<3xi32, #tpu.memory_space<smem>>) -> (i32, i32) {
    %c0_i32 = arith.constant 0 : i32
    %c0_i32_0 = arith.constant 0 : i32
    %c0_i32_1 = arith.constant 0 : i32
    return %c0_i32, %c0_i32_0 : i32, i32
  }
  func.func @transform_4(%arg0: i32, %arg1: i32, %arg2: memref<9xi32, #tpu.memory_space<smem>>, %arg3: memref<3xi32, #tpu.memory_space<smem>>) -> (i32, i32) {
    %c0_i32 = arith.constant 0 : i32
    %c0_i32_0 = arith.constant 0 : i32
    %c0_i32_1 = arith.constant 0 : i32
    return %c0_i32, %c0_i32_0 : i32, i32
  }
  func.func @transform_5(%arg0: i32, %arg1: i32, %arg2: memref<9xi32, #tpu.memory_space<smem>>, %arg3: memref<3xi32, #tpu.memory_space<smem>>) -> (i32, i32) {
    %c0_i32 = arith.constant 0 : i32
    %c0_i32_0 = arith.constant 0 : i32
    return %arg0, %c0_i32 : i32, i32
  }
}

</mosaic_0001>

<llo_original>
// kernel: tpu_custom_call.1
$region0: #{tpu_custom_call.1}
  #allocation0 [shape = 'u32[]', space=smem, size = 0x4, offset = 0x4, fixed_abs, tag = 'smem constant byte address 0x4 - core index']
  #allocation1 [shape = 'u32[144,128]{1,0:T(1,128)}', space=vmem, size = 0x12000, scoped, tag = 'internal scratch']
  #allocation2 [shape = 'f32[128,128]{1,0:T(8,128)}', space=vmem, size = 0x10000, scoped, tag = 'scratch operand']
  #allocation3 [shape = 's32[1]{0}', space=sflag, size = 0x4, scoped, tag = 'scoped memory for tpu_custom_call.1']
  #allocation4 [shape = 'u8[512]{0}', space=smem, size = 0x200, scoped, tag = 'prefetched SMEM operand 0']
  #allocation5 [shape = 'u8[512]{0}', space=smem, size = 0x200, scoped, tag = 'prefetched SMEM operand 1']
  %s0 = inlined_call_operand.vmem [shape: s32[9], index: 0, kind: input, shape index: {}]
  %s1 = inlined_call_operand.vmem [shape: s32[3], index: 1, kind: input, shape index: {}]
  %s2 = inlined_call_operand.vmem [shape: s8[384,384], index: 2, kind: input, shape index: {}]
  %s3 = inlined_call_operand.hbm [shape: bf16[384,128], index: 3, kind: input, shape index: {}]
  %s4 = inlined_call_operand.vmem [shape: f32[384,1], index: 4, kind: input, shape index: {}]
  %s5 = inlined_call_operand.vmem [shape: bf16[128,128], index: 5, kind: input, shape index: {}]
  %s6 = inlined_call_operand.vmem [shape: f32[1,128], index: 6, kind: input, shape index: {}]
  %s7 = inlined_call_operand.hbm [shape: bf16[384,128], index: 7, kind: output, shape index: {}]
  %s8 = sld [smem:[#allocation0]]
  $region107: #{tpu_custom_call.1} parent=0
    _
  %s10 = ssub.s32 1, %s8
  %s11 = scalar_select 0, %s10, %s8
  %s12 = sshll.u32 %s0, 4
  %s13 = int_to_ptr.vmem [resolvable:$true] %s12
  %15 = dma.vmem_to_smem %s13, 16, [#allocation4], [#allocation3]
  %s16 = sshll.u32 %s1, 4
  %s17 = int_to_ptr.vmem [resolvable:$true] %s16
  %19 = dma.vmem_to_smem %s17, 16, [#allocation5], [#allocation3]
  %20 = dma.done [#allocation3], 32
  %21 = sfence
  $region1: #{tpu_custom_call.1} parent=0
    #allocation6 [shape = 'u8[32768]{0}', space=vmem, size = 0x8000, scoped, tag = 'input window, operand 2']
    #allocation7 [shape = 'u8[65536]{0}', space=vmem, size = 0x10000, scoped, tag = 'input window, operand 3']
    #allocation8 [shape = 's32[2]{0}', space=sflag, size = 0x8, scoped, tag = 'scoped memory for tpu_custom_call.1']
    #allocation9 [shape = 's32[2]{0}', space=sflag, size = 0x8, scoped, tag = 'scoped memory for tpu_custom_call.1']
    #allocation10 [shape = 'u8[65536]{0}', space=vmem, size = 0x10000, scoped, tag = 'output window, operand 0']
    %22 = vsyncpa [#allocation8], 0
    %s23 = scalar_lea.sflag [#allocation8], 1
    %24 = vsyncpa %s23, 0
    %25 = vsyncpa [#allocation9], 0
    %s26 = scalar_lea.sflag [#allocation9], 1
    %27 = vsyncpa %s26, 0
    loop: start=0, step=1, limit=11
    $region2: #{tpu_custom_call.1} parent=1 // loop_pre_header
      _
    $region3: #{tpu_custom_call.1} parent=1 // loop_header
      %s29 = sphi 0, %s33
      %p30 = scmp.ge.s32.totalorder %s29, 11
      %s36 = sphi 0, %s48
      %s37 = sphi 0, %s44
      %s38 = sphi 0, %s36
      %s39 = sphi 0, %s37
      %s40 = sphi 0, %s38
      %s41 = sphi 0, %s39
      %s59 = sphi 0, %s61
      %s62 = sphi 0, %s59
      %s63 = sphi 0, %s62
      %s79 = sphi 0, %s63
      %s91 = sphi 0, %s93
      %s94 = sphi 0, %s91
      %s95 = sphi 0, %s94
      %s111 = sphi 0, %s95
      %s117 = sphi 0, %s119
      %s120 = sphi 0, %s117
      %s121 = sphi 0, %s120
      %s137 = sphi 0, %s121
      %s141 = sphi 0, %s141
      %s143 = sphi 0, %s141
      %s144 = sphi 0, %s143
      %s158 = sphi 0, %s144
      %s162 = sphi 0, %s162
      %s164 = sphi 0, %s162
      %s165 = sphi 0, %s164
      %s179 = sphi 0, %s165
      %s185 = sphi 0, %s187
      %s188 = sphi 0, %s185
      %s189 = sphi 0, %s188
      %s205 = sphi 0, %s189
    $region4: #{tpu_custom_call.1} parent=1 // loop_header_branch
      %32 = sbr.rel (%p30) target = $region8
    $region5: #{tpu_custom_call.1} parent=1 // loop_body
      %s34 = ssub.s32 %s29, 1
      %s35 = ssub.s32 %s29, 2
      %s42 = sadd.s32 1, %s37
      %p43 = scmp.ge.s32.totalorder %s42, 3
      %s44 = scalar_select %p43, 0, %s42
      %s45 = sadd.s32 1, %s36
      %s46 = scalar_select %p43, %s45, %s36
      %p47 = scmp.ge.s32.totalorder %s46, 3
      %s48 = scalar_select %p47, 0, %s46
      %s49 = smul.u32 %s36, 3
      %s50 = sadd.s32 %s49, %s37
      %s51 = sld [smem:[#allocation4 + %s50]]
      %s52 = smul.u32 %s48, 3
      %s53 = sadd.s32 %s52, %s44
      %s54 = sld [smem:[#allocation4 + %s53]]
      %s55 = ssub.s32 %s36, %s48
      %s56 = ssub.s32 %s51, %s54
      %s57 = sor.u32 %s55, %s56
      %p58 = scmp.eq.s32.totalorder %s57, 0
      %s60 = sadd.s32 %s59, 1
      %s61 = scalar_select %p58, %s59, %s60
      %p64 = pneg %p58
      %p65 = scmp.eq.s32.totalorder %s29, 8
      %p66 = por %p64, %p65
      %p67 = scmp.ne.s32.totalorder %s59, %s62
      %p68 = scmp.eq.s32.totalorder %s29, 0
      %p69 = por %p67, %p68
      %p70 = scmp.ne.s32.totalorder %s59, %s62
      %p71 = scmp.eq.s32.totalorder %s34, 8
      %p72 = por %p70, %p71
      %p73 = scmp.ne.s32.totalorder %s62, %s63
      %p74 = scmp.eq.s32.totalorder %s34, 0
      %p75 = por %p73, %p74
      %p76 = scmp.ne.s32.totalorder %s62, %s63
      %p77 = scmp.eq.s32.totalorder %s35, 8
      %p78 = por %p76, %p77
      %p80 = scmp.ne.s32.totalorder %s63, %s79
      %p81 = scmp.eq.s32.totalorder %s35, 0
      %p82 = por %p80, %p81
      %s83 = smul.u32 %s36, 3
      %s84 = sadd.s32 %s83, %s37
      %s85 = sld [smem:[#allocation4 + %s84]]
      %s86 = smul.u32 %s48, 3
      %s87 = sadd.s32 %s86, %s44
      %s88 = sld [smem:[#allocation4 + %s87]]
      %s89 = ssub.s32 %s85, %s88
      %p90 = scmp.eq.s32.totalorder %s89, 0
      %s92 = sadd.s32 %s91, 1
      %s93 = scalar_select %p90, %s91, %s92
      %p96 = pneg %p90
      %p97 = scmp.eq.s32.totalorder %s29, 8
      %p98 = por %p96, %p97
      %p99 = scmp.ne.s32.totalorder %s91, %s94
      %p100 = scmp.eq.s32.totalorder %s29, 0
      %p101 = por %p99, %p100
      %p102 = scmp.ne.s32.totalorder %s91, %s94
      %p103 = scmp.eq.s32.totalorder %s34, 8
      %p104 = por %p102, %p103
      %p105 = scmp.ne.s32.totalorder %s94, %s95
      %p106 = scmp.eq.s32.totalorder %s34, 0
      %p107 = por %p105, %p106
      %p108 = scmp.ne.s32.totalorder %s94, %s95
      %p109 = scmp.eq.s32.totalorder %s35, 8
      %p110 = por %p108, %p109
      %p112 = scmp.ne.s32.totalorder %s95, %s111
      %p113 = scmp.eq.s32.totalorder %s35, 0
      %p114 = por %p112, %p113
      %s115 = ssub.s32 %s36, %s48
      %p116 = scmp.eq.s32.totalorder %s115, 0
      %s118 = sadd.s32 %s117, 1
      %s119 = scalar_select %p116, %s117, %s118
      %p122 = pneg %p116
      %p123 = scmp.eq.s32.totalorder %s29, 8
      %p124 = por %p122, %p123
      %p125 = scmp.ne.s32.totalorder %s117, %s120
      %p126 = scmp.eq.s32.totalorder %s29, 0
      %p127 = por %p125, %p126
      %p128 = scmp.ne.s32.totalorder %s117, %s120
      %p129 = scmp.eq.s32.totalorder %s34, 8
      %p130 = por %p128, %p129
      %p131 = scmp.ne.s32.totalorder %s120, %s121
      %p132 = scmp.eq.s32.totalorder %s34, 0
      %p133 = por %p131, %p132
      %p134 = scmp.ne.s32.totalorder %s120, %s121
      %p135 = scmp.eq.s32.totalorder %s35, 8
      %p136 = por %p134, %p135
      %p138 = scmp.ne.s32.totalorder %s121, %s137
      %p139 = scmp.eq.s32.totalorder %s35, 0
      %p140 = por %p138, %p139
      %s142 = sadd.s32 %s141, 1
      %p145 = scmp.eq.s32.totalorder %s29, 8
      %p146 = scmp.ne.s32.totalorder %s141, %s143
      %p147 = scmp.eq.s32.totalorder %s29, 0
      %p148 = por %p146, %p147
      %p149 = scmp.ne.s32.totalorder %s141, %s143
      %p150 = scmp.eq.s32.totalorder %s34, 8
      %p151 = por %p149, %p150
      %p152 = scmp.ne.s32.totalorder %s143, %s144
      %p153 = scmp.eq.s32.totalorder %s34, 0
      %p154 = por %p152, %p153
      %p155 = scmp.ne.s32.totalorder %s143, %s144
      %p156 = scmp.eq.s32.totalorder %s35, 8
      %p157 = por %p155, %p156
      %p159 = scmp.ne.s32.totalorder %s144, %s158
      %p160 = scmp.eq.s32.totalorder %s35, 0
      %p161 = por %p159, %p160
      %s163 = sadd.s32 %s162, 1
      %p166 = scmp.eq.s32.totalorder %s29, 8
      %p167 = scmp.ne.s32.totalorder %s162, %s164
      %p168 = scmp.eq.s32.totalorder %s29, 0
      %p169 = por %p167, %p168
      %p170 = scmp.ne.s32.totalorder %s162, %s164
      %p171 = scmp.eq.s32.totalorder %s34, 8
      %p172 = por %p170, %p171
      %p173 = scmp.ne.s32.totalorder %s164, %s165
      %p174 = scmp.eq.s32.totalorder %s34, 0
      %p175 = por %p173, %p174
      %p176 = scmp.ne.s32.totalorder %s164, %s165
      %p177 = scmp.eq.s32.totalorder %s35, 8
      %p178 = por %p176, %p177
      %p180 = scmp.ne.s32.totalorder %s165, %s179
      %p181 = scmp.eq.s32.totalorder %s35, 0
      %p182 = por %p180, %p181
      %s183 = ssub.s32 %s36, %s48
      %p184 = scmp.eq.s32.totalorder %s183, 0
      %s186 = sadd.s32 %s185, 1
      %s187 = scalar_select %p184, %s185, %s186
      %p190 = pneg %p184
      %p191 = scmp.eq.s32.totalorder %s29, 8
      %p192 = por %p190, %p191
      %p193 = scmp.ne.s32.totalorder %s185, %s188
      %p194 = scmp.eq.s32.totalorder %s29, 0
      %p195 = por %p193, %p194
      %p196 = scmp.ne.s32.totalorder %s185, %s188
      %p197 = scmp.eq.s32.totalorder %s34, 8
      %p198 = por %p196, %p197
      %p199 = scmp.ne.s32.totalorder %s188, %s189
      %p200 = scmp.eq.s32.totalorder %s34, 0
      %p201 = por %p199, %p200
      %p202 = scmp.ne.s32.totalorder %s188, %s189
      %p203 = scmp.eq.s32.totalorder %s35, 8
      %p204 = por %p202, %p203
      %p206 = scmp.ne.s32.totalorder %s189, %s205
      %p207 = scmp.eq.s32.totalorder %s35, 0
      %p208 = por %p206, %p207
      %p209 = scmp.le.s32.totalorder 1, %s29
      %p210 = scmp.lt.s32.totalorder %s29, 10
      %p211 = pnand %p209, %p210
      %p212 = pneg %p211
      // Predicated region
      $region9: #{tpu_custom_call.1} parent=5 // pred_check
        _
      $region10: #{tpu_custom_call.1} parent=5 // pred_check_branch
        %214 = sbr.rel (%p211) target = $region12
      $region11: #{tpu_custom_call.1} parent=5 // pred_region
        %s215 = ssub.s32 %s29, 1
        // Predicated region
        $region13: #{tpu_custom_call.1} parent=11 // pred_check
          %p216 = pneg %p154
        $region14: #{tpu_custom_call.1} parent=11 // pred_check_branch
          %218 = sbr.rel (%p216) target = $region16
        $region15: #{tpu_custom_call.1} parent=11 // pred_region
          _
        $region16: #{tpu_custom_call.1} parent=11 // pred_fallthru
          _
        // Predicated region
        $region17: #{tpu_custom_call.1} parent=11 // pred_check
          %p219 = pneg %p175
        $region18: #{tpu_custom_call.1} parent=11 // pred_check_branch
          %221 = sbr.rel (%p219) target = $region20
        $region19: #{tpu_custom_call.1} parent=11 // pred_region
          _
        $region20: #{tpu_custom_call.1} parent=11 // pred_fallthru
          _
      $region12: #{tpu_custom_call.1} parent=5 // pred_fallthru
        _
      %p222 = scmp.lt.s32.totalorder %s29, 9
      // Predicated region
      $region21: #{tpu_custom_call.1} parent=5 // pred_check
        %p223 = pneg %p222
      $region22: #{tpu_custom_call.1} parent=5 // pred_check_branch
        %225 = sbr.rel (%p223) target = $region24
      $region23: #{tpu_custom_call.1} parent=5 // pred_region
        // Predicated region
        $region25: #{tpu_custom_call.1} parent=23 // pred_check
          %p226 = pneg %p69
        $region26: #{tpu_custom_call.1} parent=23 // pred_check_branch
          %228 = sbr.rel (%p226) target = $region28
        $region27: #{tpu_custom_call.1} parent=23 // pred_region
          %s229 = sand.u32 %s59, 1
          %s230 = sand.u32 %s59, 1
          %s231 = smul.addr %s230, 32
          %s232 = scalar_lea.vmem [#allocation6], %s231
          %s233 = smul.u32 %s36, 3
          %s234 = sadd.s32 %s233, %s37
          %s235 = sld [smem:[#allocation4 + %s234]]
          %s236 = smul.u32 4, %s36
          %s237 = smul.addr %s236, 3
          %s238 = sadd.s32 %s235, %s237
          %s239 = smul.addr %s238, 8
          %s240 = scalar_lea.vmem %s2, %s239
          // Predicated region
          $region29: #{tpu_custom_call.1} parent=27 // pred_check
            _
          $region30: #{tpu_custom_call.1} parent=27 // pred_check_branch
            %242 = sbr.rel (0) target = $region32
          $region31: #{tpu_custom_call.1} parent=27 // pred_region
            // Predicated region
            $region33: #{tpu_custom_call.1} parent=31 // pred_check
              _
            $region34: #{tpu_custom_call.1} parent=31 // pred_check_branch
              %244 = sbr.rel (0) target = $region36
            $region35: #{tpu_custom_call.1} parent=31 // pred_region
              // Predicated region
              $region48: #{tpu_custom_call.1} parent=35 // pred_check
                _
              $region49: #{tpu_custom_call.1} parent=35 // pred_check_branch
                %265 = sbr.rel (0) target = $region51
              $region50: #{tpu_custom_call.1} parent=35 // pred_region
                loop: start=0, step=1, limit=1
                $region52: #{tpu_custom_call.1} parent=50 // loop_pre_header
                  _
                $region53: #{tpu_custom_call.1} parent=50 // loop_header
                  %s267 = sphi 0, %s271
                  %p268 = scmp.ge.s32.totalorder %s267, 1
                  %s272 = sphi %s240, %s240
                  %s273 = sphi %s232, %s232
                $region54: #{tpu_custom_call.1} parent=50 // loop_header_branch
                  %270 = sbr.rel (%p268) target = $region58
                $region55: #{tpu_custom_call.1} parent=50 // loop_body
                  %v274 = vld [vmem:[%s272] sm:$0xff]
                  %275 = vst [vmem:[%s273] sm:$0xff] %v274
                  %v276 = vld [vmem:[%s272 + $0x18] sm:$0xff]
                  %277 = vst [vmem:[%s273 + $0x8] sm:$0xff] %v276
                  %v278 = vld [vmem:[%s272 + $0x30] sm:$0xff]
                  %279 = vst [vmem:[%s273 + $0x10] sm:$0xff] %v278
                  %v280 = vld [vmem:[%s272 + $0x48] sm:$0xff]
                  %281 = vst [vmem:[%s273 + $0x18] sm:$0xff] %v280
                $region56: #{tpu_custom_call.1} parent=50 // loop_footer
                  %s271 = sadd.s32 1, %s267
                $region57: #{tpu_custom_call.1} parent=50 // loop_footer_branch
                  %266 = sbr.rel target = $region53
                $region58: #{tpu_custom_call.1} parent=50 // loop_exit
                  _
              $region51: #{tpu_custom_call.1} parent=35 // pred_fallthru
                _
              // Predicated region
              $region59: #{tpu_custom_call.1} parent=35 // pred_check
                _
              $region60: #{tpu_custom_call.1} parent=35 // pred_check_branch
                %283 = sbr.rel target = $region62
              $region61: #{tpu_custom_call.1} parent=35 // pred_region
                _
              $region62: #{tpu_custom_call.1} parent=35 // pred_fallthru
                _
            $region36: #{tpu_custom_call.1} parent=31 // pred_fallthru
              _
            // Predicated region
            $region37: #{tpu_custom_call.1} parent=31 // pred_check
              _
            $region38: #{tpu_custom_call.1} parent=31 // pred_check_branch
              %246 = sbr.rel target = $region40
            $region39: #{tpu_custom_call.1} parent=31 // pred_region
              loop: start=0, step=1, limit=1
              $region41: #{tpu_custom_call.1} parent=39 // loop_pre_header
                _
              $region42: #{tpu_custom_call.1} parent=39 // loop_header
                %s249 = sphi 0, %s253
                %p250 = scmp.ge.s32.totalorder %s249, 1
                %s254 = sphi %s240, %s240
                %s255 = sphi %s232, %s232
              $region43: #{tpu_custom_call.1} parent=39 // loop_header_branch
                %252 = sbr.rel (%p250) target = $region47
              $region44: #{tpu_custom_call.1} parent=39 // loop_body
                %v256 = vld [vmem:[%s254] sm:$0xff]
                %257 = vst [vmem:[%s255] sm:$0xff] %v256
                %v258 = vld [vmem:[%s254 + $0x18] sm:$0xff]
                %259 = vst [vmem:[%s255 + $0x8] sm:$0xff] %v258
                %v260 = vld [vmem:[%s254 + $0x30] sm:$0xff]
                %261 = vst [vmem:[%s255 + $0x10] sm:$0xff] %v260
                %v262 = vld [vmem:[%s254 + $0x48] sm:$0xff]
                %263 = vst [vmem:[%s255 + $0x18] sm:$0xff] %v262
              $region45: #{tpu_custom_call.1} parent=39 // loop_footer
                %s253 = sadd.s32 1, %s249
              $region46: #{tpu_custom_call.1} parent=39 // loop_footer_branch
                %248 = sbr.rel target = $region42
              $region47: #{tpu_custom_call.1} parent=39 // loop_exit
                _
            $region40: #{tpu_custom_call.1} parent=31 // pred_fallthru
              _
          $region32: #{tpu_custom_call.1} parent=27 // pred_fallthru
            _
          %284 = vnop
        $region28: #{tpu_custom_call.1} parent=23 // pred_fallthru
          _
        // Predicated region
        $region63: #{tpu_custom_call.1} parent=23 // pred_check
          %p285 = pneg %p101
        $region64: #{tpu_custom_call.1} parent=23 // pred_check_branch
          %287 = sbr.rel (%p285) target = $region66
        $region65: #{tpu_custom_call.1} parent=23 // pred_region
          %s288 = sand.u32 %s91, 1
          %s289 = scalar_lea.sflag [#allocation8], %s288
          %s290 = sand.u32 %s91, 1
          %s291 = smul.addr %s290, 64
          %s292 = scalar_lea.vmem [#allocation7], %s291
          %s293 = smul.u32 %s36, 3
          %s294 = sadd.s32 %s293, %s37
          %s295 = sld [smem:[#allocation4 + %s294]]
          %s296 = smul.u32 16, %s295
          %s298 = ssub.s32 1024, 1024
          %299 = vsyncadd %s289, %s298
          %s300 = smul.addr %s296, 64
          %s301 = scalar_lea.hbm %s3, %s300
          %s302 = sshll.u32 %s292, 4
          %s303 = int_to_ptr.vmem [resolvable:$true] %s302
          %308 = dma.hbm_to_vmem [thread:$0]  %s301, 1024, %s303, %s289, 64, 64, 4
        $region66: #{tpu_custom_call.1} parent=23 // pred_fallthru
          _
        // Predicated region
        $region67: #{tpu_custom_call.1} parent=23 // pred_check
          %p309 = pneg %p127
        $region68: #{tpu_custom_call.1} parent=23 // pred_check_branch
          %311 = sbr.rel (%p309) target = $region70
        $region69: #{tpu_custom_call.1} parent=23 // pred_region
          %s312 = smul.u32 16, %s36
          %p313 = scmp.lt.s32.totalorder %s312, 47
          %s314 = scalar_select %p313, %s312, 47
          %s315 = smul.addr %s314, 8
          %s316 = scalar_lea.vmem %s4, %s315
          %s317 = smul.u32 16, %s36
        $region70: #{tpu_custom_call.1} parent=23 // pred_fallthru
          _
      $region24: #{tpu_custom_call.1} parent=5 // pred_fallthru
        _
      %p318 = scmp.le.s32.totalorder 1, %s29
      %p319 = scmp.lt.s32.totalorder %s29, 10
      %p320 = pnand %p318, %p319
      %p321 = pneg %p320
      // Predicated region
      $region71: #{tpu_custom_call.1} parent=5 // pred_check
        _
      $region72: #{tpu_custom_call.1} parent=5 // pred_check_branch
        %323 = sbr.rel (%p320) target = $region74
      $region73: #{tpu_custom_call.1} parent=5 // pred_region
        %s324 = ssub.s32 %s29, 1
        %s325 = sand.u32 %s62, 1
        %s326 = sand.u32 %s62, 1
        %s327 = smul.addr %s326, 32
        %s328 = scalar_lea.vmem [#allocation6], %s327
        // Predicated region
        $region75: #{tpu_custom_call.1} parent=73 // pred_check
          %p329 = pneg %p75
        $region76: #{tpu_custom_call.1} parent=73 // pred_check_branch
          %331 = sbr.rel (%p329) target = $region78
        $region77: #{tpu_custom_call.1} parent=73 // pred_region
          _
        $region78: #{tpu_custom_call.1} parent=73 // pred_fallthru
          _
        %s332 = sand.u32 %s94, 1
        %s333 = scalar_lea.sflag [#allocation8], %s332
        %s334 = sand.u32 %s94, 1
        %s335 = smul.addr %s334, 64
        %s336 = scalar_lea.vmem [#allocation7], %s335
        // Predicated region
        $region79: #{tpu_custom_call.1} parent=73 // pred_check
          %p337 = pneg %p107
        $region80: #{tpu_custom_call.1} parent=73 // pred_check_branch
          %339 = sbr.rel (%p337) target = $region82
        $region81: #{tpu_custom_call.1} parent=73 // pred_region
          %340 = dma.done %s333, 1024
        $region82: #{tpu_custom_call.1} parent=73 // pred_fallthru
          _
        %s341 = sand.u32 %s62, 1
        %s342 = sand.u32 %s62, 1
        %s343 = smul.addr %s342, 32
        %s344 = scalar_lea.vmem [#allocation6], %s343
        %p345 = pneg %p75
        %p346 = pneg %p72
        %s347 = sand.u32 %s94, 1
        %s348 = scalar_lea.sflag [#allocation8], %s347
        %s349 = sand.u32 %s94, 1
        %s350 = smul.addr %s349, 64
        %s351 = scalar_lea.vmem [#allocation7], %s350
        %p352 = pneg %p107
        %p353 = pneg %p104
        %s354 = smul.u32 16, %s38
        %p355 = scmp.lt.s32.totalorder %s354, 47
        %s356 = scalar_select %p355, %s354, 47
        %s357 = smul.addr %s356, 8
        %s358 = scalar_lea.vmem %s4, %s357
        %p359 = pneg %p133
        %p360 = pneg %p130
        %p361 = pneg %p154
        %p362 = pneg %p151
        %p363 = pneg %p175
        %p364 = pneg %p172
        %p365 = pneg %p201
        %p366 = pneg %p198
        %s367 = sand.u32 %s188, 1
        %s368 = scalar_lea.sflag [#allocation9], %s367
        %s369 = sand.u32 %s188, 1
        %s370 = smul.addr %s369, 64
        %s371 = scalar_lea.vmem [#allocation10], %s370
        %s372 = smul.u32 %s38, 3
        %s373 = sadd.s32 %s372, %s39
        %s374 = sld [smem:[#allocation4 + %s373]]
        %s375 = smul.u32 4, %s38
        %s376 = smul.u32 %s38, 3
        %s377 = sadd.s32 %s376, %s39
        %s378 = sld [smem:[#allocation4 + %s377]]
        %s379 = smul.u32 16, %s378
        %s380 = smul.u32 16, %s38
        %p381 = scmp.lt.s32.totalorder %s380, 47
        %s382 = scalar_select %p381, %s380, 47
        %s383 = smul.addr %s382, 8
        %s384 = scalar_lea.vmem %s4, %s383
        %s385 = smul.u32 16, %s38
        %s386 = smul.u32 16, %s38
        %p388 = scmp.eq.s32.totalorder %s39, 0
        // Predicated region
        $region83: #{tpu_custom_call.1} parent=73 // pred_check
          %p389 = pneg %p388
        $region84: #{tpu_custom_call.1} parent=73 // pred_check_branch
          %391 = sbr.rel (%p389) target = $region86
        $region85: #{tpu_custom_call.1} parent=73 // pred_region
          %392 = vst [vmem:[#allocation2] sm:$0xff] 0.0
          %393 = vst [vmem:[#allocation2 + $0x8] sm:$0xff] 0.0
          %394 = vst [vmem:[#allocation2 + $0x10] sm:$0xff] 0.0
          %395 = vst [vmem:[#allocation2 + $0x18] sm:$0xff] 0.0
          %396 = vst [vmem:[#allocation2 + $0x20] sm:$0xff] 0.0
          %397 = vst [vmem:[#allocation2 + $0x28] sm:$0xff] 0.0
          %398 = vst [vmem:[#allocation2 + $0x30] sm:$0xff] 0.0
          %399 = vst [vmem:[#allocation2 + $0x38] sm:$0xff] 0.0
          %400 = vst [vmem:[#allocation2 + $0x40] sm:$0xff] 0.0
          %401 = vst [vmem:[#allocation2 + $0x48] sm:$0xff] 0.0
          %402 = vst [vmem:[#allocation2 + $0x50] sm:$0xff] 0.0
          %403 = vst [vmem:[#allocation2 + $0x58] sm:$0xff] 0.0
          %404 = vst [vmem:[#allocation2 + $0x60] sm:$0xff] 0.0
          %405 = vst [vmem:[#allocation2 + $0x68] sm:$0xff] 0.0
          %406 = vst [vmem:[#allocation2 + $0x70] sm:$0xff] 0.0
          %407 = vst [vmem:[#allocation2 + $0x78] sm:$0xff] 0.0
        $region86: #{tpu_custom_call.1} parent=73 // pred_fallthru
          _
        %s408 = sld [smem:[#allocation5 + %s38]]
        %p409 = scmp.lt.s32.totalorder %s39, %s408
        // Predicated region
        $region87: #{tpu_custom_call.1} parent=73 // pred_check
          %p410 = pneg %p409
        $region88: #{tpu_custom_call.1} parent=73 // pred_check_branch
          %412 = sbr.rel (%p410) target = $region90
        $region89: #{tpu_custom_call.1} parent=73 // pred_region
          %v413 = vld [vmem:[%s328] sm:$0xff]
          %v414 = vld [vmem:[%s328 + $0x8] sm:$0xff]
          %v415 = vld [vmem:[%s328 + $0x10] sm:$0xff]
          %v416 = vld [vmem:[%s328 + $0x18] sm:$0xff]
          %v417 = vunpack.c.l.s8.bf16 %v413
          %v418 = vunpack.c.h.s8.bf16 %v413
          %v419 = vunpack.c.l.s8.bf16 %v414
          %v420 = vunpack.c.h.s8.bf16 %v414
          %v421 = vunpack.c.l.s8.bf16 %v415
          %v422 = vunpack.c.h.s8.bf16 %v415
          %v423 = vunpack.c.l.s8.bf16 %v416
          %v424 = vunpack.c.h.s8.bf16 %v416
          %v425 = vld [vmem:[#allocation2] sm:$0xff]
          %v426 = vld [vmem:[#allocation2 + $0x8] sm:$0xff]
          %v427 = vld [vmem:[#allocation2 + $0x10] sm:$0xff]
          %v428 = vld [vmem:[#allocation2 + $0x18] sm:$0xff]
          %v429 = vld [vmem:[#allocation2 + $0x20] sm:$0xff]
          %v430 = vld [vmem:[#allocation2 + $0x28] sm:$0xff]
          %v431 = vld [vmem:[#allocation2 + $0x30] sm:$0xff]
          %v432 = vld [vmem:[#allocation2 + $0x38] sm:$0xff]
          %v433 = vld [vmem:[#allocation2 + $0x40] sm:$0xff]
          %v434 = vld [vmem:[#allocation2 + $0x48] sm:$0xff]
          %v435 = vld [vmem:[#allocation2 + $0x50] sm:$0xff]
          %v436 = vld [vmem:[#allocation2 + $0x58] sm:$0xff]
          %v437 = vld [vmem:[#allocation2 + $0x60] sm:$0xff]
          %v438 = vld [vmem:[#allocation2 + $0x68] sm:$0xff]
          %v439 = vld [vmem:[#allocation2 + $0x70] sm:$0xff]
          %v440 = vld [vmem:[#allocation2 + $0x78] sm:$0xff]
          %v441 = vld [vmem:[%s336] sm:$0xf]
          %v442 = vld [vmem:[%s336 + $0x4] sm:$0xf]
          %v443 = vld [vmem:[%s336 + $0x8] sm:$0xf]
          %v444 = vld [vmem:[%s336 + $0xc] sm:$0xf]
          %v445 = vld [vmem:[%s336 + $0x10] sm:$0xf]
          %v446 = vld [vmem:[%s336 + $0x14] sm:$0xf]
          %v447 = vld [vmem:[%s336 + $0x18] sm:$0xf]
          %v448 = vld [vmem:[%s336 + $0x1c] sm:$0xf]
          %v449 = vld [vmem:[%s336 + $0x20] sm:$0xf]
          %v450 = vld [vmem:[%s336 + $0x24] sm:$0xf]
          %v451 = vld [vmem:[%s336 + $0x28] sm:$0xf]
          %v452 = vld [vmem:[%s336 + $0x2c] sm:$0xf]
          %v453 = vld [vmem:[%s336 + $0x30] sm:$0xf]
          %v454 = vld [vmem:[%s336 + $0x34] sm:$0xf]
          %v455 = vld [vmem:[%s336 + $0x38] sm:$0xf]
          %v456 = vld [vmem:[%s336 + $0x3c] sm:$0xf]
          %v473 = vunpack.c.l.b16 %v441
          %v474 = vunpack.c.l.b16 %v442
          %v475 = vunpack.c.l.b16 %v443
          %v476 = vunpack.c.l.b16 %v444
          %v477 = vunpack.c.l.b16 %v445
          %v478 = vunpack.c.l.b16 %v446
          %v479 = vunpack.c.l.b16 %v447
          %v480 = vunpack.c.l.b16 %v448
          %v481 = vunpack.c.l.b16 %v449
          %v482 = vunpack.c.l.b16 %v450
          %v483 = vunpack.c.l.b16 %v451
          %v484 = vunpack.c.l.b16 %v452
          %v485 = vunpack.c.l.b16 %v453
          %v486 = vunpack.c.l.b16 %v454
          %v487 = vunpack.c.l.b16 %v455
          %v488 = vunpack.c.l.b16 %v456
          %v489 = vpack.c.b16 %v474, %v473
          %v490 = vpack.c.b16 %v476, %v475
          %v491 = vpack.c.b16 %v478, %v477
          %v492 = vpack.c.b16 %v480, %v479
          %v493 = vpack.c.b16 %v482, %v481
          %v494 = vpack.c.b16 %v484, %v483
          %v495 = vpack.c.b16 %v486, %v485
          %v496 = vpack.c.b16 %v488, %v487
          %505 = vmatprep.subr.bf16.mxu0 0
          %506 = vmatpush1.bf16.msra.mxu0 %v489
          %507 = vmatprep.subr.bf16.mxu0 0
          %508 = vmatpush1.bf16.msra.mxu0 %v490
          %509 = vmatprep.subr.bf16.mxu0 0
          %510 = vmatpush1.bf16.msra.mxu0 %v491
          %511 = vmatprep.subr.bf16.mxu0 0
          %512 = vmatpush1.bf16.msra.mxu0 %v492
          %513 = vmatprep.subr.bf16.mxu0 0
          %514 = vmatpush1.bf16.msra.mxu0 %v493
          %515 = vmatprep.subr.bf16.mxu0 0
          %516 = vmatpush1.bf16.msra.mxu0 %v494
          %517 = vmatprep.subr.bf16.mxu0 0
          %518 = vmatpush1.bf16.msra.mxu0 %v495
          %519 = vmatprep.subr.bf16.mxu0 0
          %520 = vmatpush1.bf16.msra.mxu0 %v496
          %521 = vmatprep.subr.bf16.mxu0 0
          %522 = vmatpush1.bf16.msra.mxu0 0
          %523 = vmatprep.subr.bf16.mxu0 0
          %524 = vmatpush1.bf16.msra.mxu0 0
          %525 = vmatprep.subr.bf16.mxu0 0
          %526 = vmatpush1.bf16.msra.mxu0 0
          %527 = vmatprep.subr.bf16.mxu0 0
          %528 = vmatpush1.bf16.msra.mxu0 0
          %529 = vmatprep.subr.bf16.mxu0 0
          %530 = vmatpush1.bf16.msra.mxu0 0
          %531 = vmatprep.subr.bf16.mxu0 0
          %532 = vmatpush1.bf16.msra.mxu0 0
          %533 = vmatprep.subr.bf16.mxu0 0
          %534 = vmatpush1.bf16.msra.mxu0 0
          %535 = vmatprep.subr.bf16.mxu0 0
          %536 = vmatpush1.bf16.msra.mxu0 0
          %537 = vmatprep.mubr.bf16.mxu0 0
          %538 = vmatmul.mubr.bf16.gmra.mrb[0].mxu0 %v417
          %v539 = vpop.f32.mrb[0].mxu0
          %v540 = vadd.f32 0.0, %v539
          %v541 = vpop.f32.mrb[0].mxu0
          %v542 = vpop.f32.mrb[0].mxu0
          %v543 = vadd.f32 0.0, %v542
          %v544 = vpop.f32.mrb[0].mxu0
          %545 = vmatprep.mubr.bf16.mxu0 0
          %546 = vmatmul.mubr.bf16.gmra.mrb[0].mxu0 %v418
          %v547 = vpop.f32.mrb[0].mxu0
          %v548 = vadd.f32 0.0, %v547
          %v549 = vpop.f32.mrb[0].mxu0
          %v550 = vpop.f32.mrb[0].mxu0
          %v551 = vadd.f32 0.0, %v550
          %v552 = vpop.f32.mrb[0].mxu0
          %553 = vmatprep.mubr.bf16.mxu0 0
          %554 = vmatmul.mubr.bf16.gmra.mrb[0].mxu0 %v419
          %v555 = vpop.f32.mrb[0].mxu0
          %v556 = vadd.f32 0.0, %v555
          %v557 = vpop.f32.mrb[0].mxu0
          %v558 = vpop.f32.mrb[0].mxu0
          %v559 = vadd.f32 0.0, %v558
          %v560 = vpop.f32.mrb[0].mxu0
          %561 = vmatprep.mubr.bf16.mxu0 0
          %562 = vmatmul.mubr.bf16.gmra.mrb[0].mxu0 %v420
          %v563 = vpop.f32.mrb[0].mxu0
          %v564 = vadd.f32 0.0, %v563
          %v565 = vpop.f32.mrb[0].mxu0
          %v566 = vpop.f32.mrb[0].mxu0
          %v567 = vadd.f32 0.0, %v566
          %v568 = vpop.f32.mrb[0].mxu0
          %569 = vmatprep.mubr.bf16.mxu0 0
          %570 = vmatmul.mubr.bf16.gmra.mrb[0].mxu0 %v421
          %v571 = vpop.f32.mrb[0].mxu0
          %v572 = vadd.f32 0.0, %v571
          %v573 = vpop.f32.mrb[0].mxu0
          %v574 = vpop.f32.mrb[0].mxu0
          %v575 = vadd.f32 0.0, %v574
          %v576 = vpop.f32.mrb[0].mxu0
          %577 = vmatprep.mubr.bf16.mxu0 0
          %578 = vmatmul.mubr.bf16.gmra.mrb[0].mxu0 %v422
          %v579 = vpop.f32.mrb[0].mxu0
          %v580 = vadd.f32 0.0, %v579
          %v581 = vpop.f32.mrb[0].mxu0
          %v582 = vpop.f32.mrb[0].mxu0
          %v583 = vadd.f32 0.0, %v582
          %v584 = vpop.f32.mrb[0].mxu0
          %585 = vmatprep.mubr.bf16.mxu0 0
          %586 = vmatmul.mubr.bf16.gmra.mrb[0].mxu0 %v423
          %v587 = vpop.f32.mrb[0].mxu0
          %v588 = vadd.f32 0.0, %v587
          %v589 = vpop.f32.mrb[0].mxu0
          %v590 = vpop.f32.mrb[0].mxu0
          %v591 = vadd.f32 0.0, %v590
          %v592 = vpop.f32.mrb[0].mxu0
          %593 = vmatprep.mubr.bf16.mxu0 0
          %594 = vmatmul.mubr.bf16.gmra.mrb[0].mxu0 %v424
          %v595 = vpop.f32.mrb[0].mxu0
          %v596 = vadd.f32 0.0, %v595
          %v597 = vpop.f32.mrb[0].mxu0
          %v598 = vpop.f32.mrb[0].mxu0
          %v599 = vadd.f32 0.0, %v598
          %v600 = vpop.f32.mrb[0].mxu0
          %601 = vdwg.mxu0
          %v602 = vadd.f32 %v425, %v540
          %v603 = vadd.f32 %v426, %v543
          %v604 = vadd.f32 %v427, %v548
          %v605 = vadd.f32 %v428, %v551
          %v606 = vadd.f32 %v429, %v556
          %v607 = vadd.f32 %v430, %v559
          %v608 = vadd.f32 %v431, %v564
          %v609 = vadd.f32 %v432, %v567
          %v610 = vadd.f32 %v433, %v572
          %v611 = vadd.f32 %v434, %v575
          %v612 = vadd.f32 %v435, %v580
          %v613 = vadd.f32 %v436, %v583
          %v614 = vadd.f32 %v437, %v588
          %v615 = vadd.f32 %v438, %v591
          %v616 = vadd.f32 %v439, %v596
          %v617 = vadd.f32 %v440, %v599
          %618 = vst [vmem:[#allocation2] sm:$0xff] %v602
          %619 = vst [vmem:[#allocation2 + $0x8] sm:$0xff] %v603
          %620 = vst [vmem:[#allocation2 + $0x10] sm:$0xff] %v604
          %621 = vst [vmem:[#allocation2 + $0x18] sm:$0xff] %v605
          %622 = vst [vmem:[#allocation2 + $0x20] sm:$0xff] %v606
          %623 = vst [vmem:[#allocation2 + $0x28] sm:$0xff] %v607
          %624 = vst [vmem:[#allocation2 + $0x30] sm:$0xff] %v608
          %625 = vst [vmem:[#allocation2 + $0x38] sm:$0xff] %v609
          %626 = vst [vmem:[#allocation2 + $0x40] sm:$0xff] %v610
          %627 = vst [vmem:[#allocation2 + $0x48] sm:$0xff] %v611
          %628 = vst [vmem:[#allocation2 + $0x50] sm:$0xff] %v612
          %629 = vst [vmem:[#allocation2 + $0x58] sm:$0xff] %v613
          %630 = vst [vmem:[#allocation2 + $0x60] sm:$0xff] %v614
          %631 = vst [vmem:[#allocation2 + $0x68] sm:$0xff] %v615
          %632 = vst [vmem:[#allocation2 + $0x70] sm:$0xff] %v616
          %633 = vst [vmem:[#allocation2 + $0x78] sm:$0xff] %v617
        $region90: #{tpu_custom_call.1} parent=73 // pred_fallthru
          _
        %p634 = scmp.eq.s32.totalorder %s39, 2
        // Predicated region
        $region91: #{tpu_custom_call.1} parent=73 // pred_check
          %p635 = pneg %p634
        $region92: #{tpu_custom_call.1} parent=73 // pred_check_branch
          %637 = sbr.rel (%p635) target = $region94
        $region93: #{tpu_custom_call.1} parent=73 // pred_region
          %v638 = vld [vmem:[#allocation2] sm:$0xff]
          %v639 = vld [vmem:[#allocation2 + $0x8] sm:$0xff]
          %v640 = vld [vmem:[#allocation2 + $0x10] sm:$0xff]
          %v641 = vld [vmem:[#allocation2 + $0x18] sm:$0xff]
          %v642 = vld [vmem:[#allocation2 + $0x20] sm:$0xff]
          %v643 = vld [vmem:[#allocation2 + $0x28] sm:$0xff]
          %v644 = vld [vmem:[#allocation2 + $0x30] sm:$0xff]
          %v645 = vld [vmem:[#allocation2 + $0x38] sm:$0xff]
          %v646 = vld [vmem:[#allocation2 + $0x40] sm:$0xff]
          %v647 = vld [vmem:[#allocation2 + $0x48] sm:$0xff]
          %v648 = vld [vmem:[#allocation2 + $0x50] sm:$0xff]
          %v649 = vld [vmem:[#allocation2 + $0x58] sm:$0xff]
          %v650 = vld [vmem:[#allocation2 + $0x60] sm:$0xff]
          %v651 = vld [vmem:[#allocation2 + $0x68] sm:$0xff]
          %v652 = vld [vmem:[#allocation2 + $0x70] sm:$0xff]
          %v653 = vld [vmem:[#allocation2 + $0x78] sm:$0xff]
          %v654 = vpack.c.bf16 %v639, %v638
          %v655 = vpack.c.bf16 %v641, %v640
          %v656 = vpack.c.bf16 %v643, %v642
          %v657 = vpack.c.bf16 %v645, %v644
          %v658 = vpack.c.bf16 %v647, %v646
          %v659 = vpack.c.bf16 %v649, %v648
          %v660 = vpack.c.bf16 %v651, %v650
          %v661 = vpack.c.bf16 %v653, %v652
          %v662 = vld [vmem:[%s5] sm:$0xf]
          %v663 = vld [vmem:[%s5 + $0x4] sm:$0xf]
          %v664 = vld [vmem:[%s5 + $0x8] sm:$0xf]
          %v665 = vld [vmem:[%s5 + $0xc] sm:$0xf]
          %v666 = vld [vmem:[%s5 + $0x10] sm:$0xf]
          %v667 = vld [vmem:[%s5 + $0x14] sm:$0xf]
          %v668 = vld [vmem:[%s5 + $0x18] sm:$0xf]
          %v669 = vld [vmem:[%s5 + $0x1c] sm:$0xf]
          %v670 = vld [vmem:[%s5 + $0x20] sm:$0xf]
          %v671 = vld [vmem:[%s5 + $0x24] sm:$0xf]
          %v672 = vld [vmem:[%s5 + $0x28] sm:$0xf]
          %v673 = vld [vmem:[%s5 + $0x2c] sm:$0xf]
          %v674 = vld [vmem:[%s5 + $0x30] sm:$0xf]
          %v675 = vld [vmem:[%s5 + $0x34] sm:$0xf]
          %v676 = vld [vmem:[%s5 + $0x38] sm:$0xf]
          %v677 = vld [vmem:[%s5 + $0x3c] sm:$0xf]
          %v694 = vunpack.c.l.b16 %v662
          %v695 = vunpack.c.l.b16 %v663
          %v696 = vunpack.c.l.b16 %v664
          %v697 = vunpack.c.l.b16 %v665
          %v698 = vunpack.c.l.b16 %v666
          %v699 = vunpack.c.l.b16 %v667
          %v700 = vunpack.c.l.b16 %v668
          %v701 = vunpack.c.l.b16 %v669
          %v702 = vunpack.c.l.b16 %v670
          %v703 = vunpack.c.l.b16 %v671
          %v704 = vunpack.c.l.b16 %v672
          %v705 = vunpack.c.l.b16 %v673
          %v706 = vunpack.c.l.b16 %v674
          %v707 = vunpack.c.l.b16 %v675
          %v708 = vunpack.c.l.b16 %v676
          %v709 = vunpack.c.l.b16 %v677
          %v710 = vpack.c.b16 %v695, %v694
          %v711 = vpack.c.b16 %v697, %v696
          %v712 = vpack.c.b16 %v699, %v698
          %v713 = vpack.c.b16 %v701, %v700
          %v714 = vpack.c.b16 %v703, %v702
          %v715 = vpack.c.b16 %v705, %v704
          %v716 = vpack.c.b16 %v707, %v706
          %v717 = vpack.c.b16 %v709, %v708
          %726 = vmatprep.subr.bf16.mxu0 0
          %727 = vmatpush1.bf16.msra.mxu0 %v710
          %728 = vmatprep.subr.bf16.mxu0 0
          %729 = vmatpush1.bf16.msra.mxu0 %v711
          %730 = vmatprep.subr.bf16.mxu0 0
          %731 = vmatpush1.bf16.msra.mxu0 %v712
          %732 = vmatprep.subr.bf16.mxu0 0
          %733 = vmatpush1.bf16.msra.mxu0 %v713
          %734 = vmatprep.subr.bf16.mxu0 0
          %735 = vmatpush1.bf16.msra.mxu0 %v714
          %736 = vmatprep.subr.bf16.mxu0 0
          %737 = vmatpush1.bf16.msra.mxu0 %v715
          %738 = vmatprep.subr.bf16.mxu0 0
          %739 = vmatpush1.bf16.msra.mxu0 %v716
          %740 = vmatprep.subr.bf16.mxu0 0
          %741 = vmatpush1.bf16.msra.mxu0 %v717
          %742 = vmatprep.subr.bf16.mxu0 0
          %743 = vmatpush1.bf16.msra.mxu0 0
          %744 = vmatprep.subr.bf16.mxu0 0
          %745 = vmatpush1.bf16.msra.mxu0 0
          %746 = vmatprep.subr.bf16.mxu0 0
          %747 = vmatpush1.bf16.msra.mxu0 0
          %748 = vmatprep.subr.bf16.mxu0 0
          %749 = vmatpush1.bf16.msra.mxu0 0
          %750 = vmatprep.subr.bf16.mxu0 0
          %751 = vmatpush1.bf16.msra.mxu0 0
          %752 = vmatprep.subr.bf16.mxu0 0
          %753 = vmatpush1.bf16.msra.mxu0 0
          %754 = vmatprep.subr.bf16.mxu0 0
          %755 = vmatpush1.bf16.msra.mxu0 0
          %756 = vmatprep.subr.bf16.mxu0 0
          %757 = vmatpush1.bf16.msra.mxu0 0
          %758 = vmatprep.mubr.bf16.mxu0 0
          %759 = vmatmul.mubr.bf16.gmra.mrb[0].mxu0 %v654
          %v760 = vpop.f32.mrb[0].mxu0
          %v761 = vadd.f32 0.0, %v760
          %v762 = vpop.f32.mrb[0].mxu0
          %v763 = vpop.f32.mrb[0].mxu0
          %v764 = vadd.f32 0.0, %v763
          %v765 = vpop.f32.mrb[0].mxu0
          %766 = vmatprep.mubr.bf16.mxu0 0
          %767 = vmatmul.mubr.bf16.gmra.mrb[0].mxu0 %v655
          %v768 = vpop.f32.mrb[0].mxu0
          %v769 = vadd.f32 0.0, %v768
          %v770 = vpop.f32.mrb[0].mxu0
          %v771 = vpop.f32.mrb[0].mxu0
          %v772 = vadd.f32 0.0, %v771
          %v773 = vpop.f32.mrb[0].mxu0
          %774 = vmatprep.mubr.bf16.mxu0 0
          %775 = vmatmul.mubr.bf16.gmra.mrb[0].mxu0 %v656
          %v776 = vpop.f32.mrb[0].mxu0
          %v777 = vadd.f32 0.0, %v776
          %v778 = vpop.f32.mrb[0].mxu0
          %v779 = vpop.f32.mrb[0].mxu0
          %v780 = vadd.f32 0.0, %v779
          %v781 = vpop.f32.mrb[0].mxu0
          %782 = vmatprep.mubr.bf16.mxu0 0
          %783 = vmatmul.mubr.bf16.gmra.mrb[0].mxu0 %v657
          %v784 = vpop.f32.mrb[0].mxu0
          %v785 = vadd.f32 0.0, %v784
          %v786 = vpop.f32.mrb[0].mxu0
          %v787 = vpop.f32.mrb[0].mxu0
          %v788 = vadd.f32 0.0, %v787
          %v789 = vpop.f32.mrb[0].mxu0
          %790 = vmatprep.mubr.bf16.mxu0 0
          %791 = vmatmul.mubr.bf16.gmra.mrb[0].mxu0 %v658
          %v792 = vpop.f32.mrb[0].mxu0
          %v793 = vadd.f32 0.0, %v792
          %v794 = vpop.f32.mrb[0].mxu0
          %v795 = vpop.f32.mrb[0].mxu0
          %v796 = vadd.f32 0.0, %v795
          %v797 = vpop.f32.mrb[0].mxu0
          %798 = vmatprep.mubr.bf16.mxu0 0
          %799 = vmatmul.mubr.bf16.gmra.mrb[0].mxu0 %v659
          %v800 = vpop.f32.mrb[0].mxu0
          %v801 = vadd.f32 0.0, %v800
          %v802 = vpop.f32.mrb[0].mxu0
          %v803 = vpop.f32.mrb[0].mxu0
          %v804 = vadd.f32 0.0, %v803
          %v805 = vpop.f32.mrb[0].mxu0
          %806 = vmatprep.mubr.bf16.mxu0 0
          %807 = vmatmul.mubr.bf16.gmra.mrb[0].mxu0 %v660
          %v808 = vpop.f32.mrb[0].mxu0
          %v809 = vadd.f32 0.0, %v808
          %v810 = vpop.f32.mrb[0].mxu0
          %v811 = vpop.f32.mrb[0].mxu0
          %v812 = vadd.f32 0.0, %v811
          %v813 = vpop.f32.mrb[0].mxu0
          %814 = vmatprep.mubr.bf16.mxu0 0
          %815 = vmatmul.mubr.bf16.gmra.mrb[0].mxu0 %v661
          %v816 = vpop.f32.mrb[0].mxu0
          %v817 = vadd.f32 0.0, %v816
          %v818 = vpop.f32.mrb[0].mxu0
          %v819 = vpop.f32.mrb[0].mxu0
          %v820 = vadd.f32 0.0, %v819
          %v821 = vpop.f32.mrb[0].mxu0
          %822 = vdwg.mxu0
          %v823 = vld [vmem:[%s384] sm:$0xff]
          %v824 = vld [vmem:[%s384 + $0x8] sm:$0xff]
          %v825 = vld [vmem:[%s384 + $0x10] sm:$0xff]
          %v826 = vld [vmem:[%s384 + $0x18] sm:$0xff]
          %v827 = vld [vmem:[%s384 + $0x20] sm:$0xff]
          %v828 = vld [vmem:[%s384 + $0x28] sm:$0xff]
          %v829 = vld [vmem:[%s384 + $0x30] sm:$0xff]
          %v830 = vld [vmem:[%s384 + $0x38] sm:$0xff]
          %v831 = vld [vmem:[%s384 + $0x40] sm:$0xff]
          %v832 = vld [vmem:[%s384 + $0x48] sm:$0xff]
          %v833 = vld [vmem:[%s384 + $0x50] sm:$0xff]
          %v834 = vld [vmem:[%s384 + $0x58] sm:$0xff]
          %v835 = vld [vmem:[%s384 + $0x60] sm:$0xff]
          %v836 = vld [vmem:[%s384 + $0x68] sm:$0xff]
          %v837 = vld [vmem:[%s384 + $0x70] sm:$0xff]
          %v838 = vld [vmem:[%s384 + $0x78] sm:$0xff]
          %840 = vset.pattern.permute.xlu0 0
          %841 = vperm.xlu0 %840, %v823
          %v842 = vpop.permute.xlu0 %841
          %845 = vset.pattern.permute.xlu0 0
          %846 = vperm.xlu0 %845, %v824
          %v847 = vpop.permute.xlu0 %846
          %850 = vset.pattern.permute.xlu0 0
          %851 = vperm.xlu0 %850, %v825
          %v852 = vpop.permute.xlu0 %851
          %855 = vset.pattern.permute.xlu0 0
          %856 = vperm.xlu0 %855, %v826
          %v857 = vpop.permute.xlu0 %856
          %860 = vset.pattern.permute.xlu0 0
          %861 = vperm.xlu0 %860, %v827
          %v862 = vpop.permute.xlu0 %861
          %865 = vset.pattern.permute.xlu0 0
          %866 = vperm.xlu0 %865, %v828
          %v867 = vpop.permute.xlu0 %866
          %870 = vset.pattern.permute.xlu0 0
          %871 = vperm.xlu0 %870, %v829
          %v872 = vpop.permute.xlu0 %871
          %875 = vset.pattern.permute.xlu0 0
          %876 = vperm.xlu0 %875, %v830
          %v877 = vpop.permute.xlu0 %876
          %880 = vset.pattern.permute.xlu0 0
          %881 = vperm.xlu0 %880, %v831
          %v882 = vpop.permute.xlu0 %881
          %885 = vset.pattern.permute.xlu0 0
          %886 = vperm.xlu0 %885, %v832
          %v887 = vpop.permute.xlu0 %886
          %890 = vset.pattern.permute.xlu0 0
          %891 = vperm.xlu0 %890, %v833
          %v892 = vpop.permute.xlu0 %891
          %895 = vset.pattern.permute.xlu0 0
          %896 = vperm.xlu0 %895, %v834
          %v897 = vpop.permute.xlu0 %896
          %900 = vset.pattern.permute.xlu0 0
          %901 = vperm.xlu0 %900, %v835
          %v902 = vpop.permute.xlu0 %901
          %905 = vset.pattern.permute.xlu0 0
          %906 = vperm.xlu0 %905, %v836
          %v907 = vpop.permute.xlu0 %906
          %910 = vset.pattern.permute.xlu0 0
          %911 = vperm.xlu0 %910, %v837
          %v912 = vpop.permute.xlu0 %911
          %915 = vset.pattern.permute.xlu0 0
          %916 = vperm.xlu0 %915, %v838
          %v917 = vpop.permute.xlu0 %916
          %v919 = vmul.f32 %v761, %v842
          %v920 = vmul.f32 %v764, %v847
          %v921 = vmul.f32 %v769, %v852
          %v922 = vmul.f32 %v772, %v857
          %v923 = vmul.f32 %v777, %v862
          %v924 = vmul.f32 %v780, %v867
          %v925 = vmul.f32 %v785, %v872
          %v926 = vmul.f32 %v788, %v877
          %v927 = vmul.f32 %v793, %v882
          %v928 = vmul.f32 %v796, %v887
          %v929 = vmul.f32 %v801, %v892
          %v930 = vmul.f32 %v804, %v897
          %v931 = vmul.f32 %v809, %v902
          %v932 = vmul.f32 %v812, %v907
          %v933 = vmul.f32 %v817, %v912
          %v934 = vmul.f32 %v820, %v917
          %v935 = vld [vmem:[%s6] sm:$0x1]
          %v937 = vlaneseq
          %v938 = vshrl.u32 %v937, 7
          %v939 = vsub.s32 0, %v938
          %v940 = vrot.slane %v935, %v939
          %v942 = vadd.f32 %v919, %v940
          %v943 = vadd.f32 %v920, %v940
          %v944 = vadd.f32 %v921, %v940
          %v945 = vadd.f32 %v922, %v940
          %v946 = vadd.f32 %v923, %v940
          %v947 = vadd.f32 %v924, %v940
          %v948 = vadd.f32 %v925, %v940
          %v949 = vadd.f32 %v926, %v940
          %v950 = vadd.f32 %v927, %v940
          %v951 = vadd.f32 %v928, %v940
          %v952 = vadd.f32 %v929, %v940
          %v953 = vadd.f32 %v930, %v940
          %v954 = vadd.f32 %v931, %v940
          %v955 = vadd.f32 %v932, %v940
          %v956 = vadd.f32 %v933, %v940
          %v957 = vadd.f32 %v934, %v940
          %v958 = vmax.f32 %v942, 0.0
          %v959 = vmax.f32 %v943, 0.0
          %v960 = vmax.f32 %v944, 0.0
          %v961 = vmax.f32 %v945, 0.0
          %v962 = vmax.f32 %v946, 0.0
          %v963 = vmax.f32 %v947, 0.0
          %v964 = vmax.f32 %v948, 0.0
          %v965 = vmax.f32 %v949, 0.0
          %v966 = vmax.f32 %v950, 0.0
          %v967 = vmax.f32 %v951, 0.0
          %v968 = vmax.f32 %v952, 0.0
          %v969 = vmax.f32 %v953, 0.0
          %v970 = vmax.f32 %v954, 0.0
          %v971 = vmax.f32 %v955, 0.0
          %v972 = vmax.f32 %v956, 0.0
          %v973 = vmax.f32 %v957, 0.0
          %v974 = vpack.c.bf16 %v959, %v958
          %v975 = vpack.c.bf16 %v961, %v960
          %v976 = vpack.c.bf16 %v963, %v962
          %v977 = vpack.c.bf16 %v965, %v964
          %v978 = vpack.c.bf16 %v967, %v966
          %v979 = vpack.c.bf16 %v969, %v968
          %v980 = vpack.c.bf16 %v971, %v970
          %v981 = vpack.c.bf16 %v973, %v972
          %v990 = vunpack.c.l.b16 %v974
          %v991 = vunpack.c.h.b16 %v974
          %v992 = vunpack.c.l.b16 %v975
          %v993 = vunpack.c.h.b16 %v975
          %v994 = vunpack.c.l.b16 %v976
          %v995 = vunpack.c.h.b16 %v976
          %v996 = vunpack.c.l.b16 %v977
          %v997 = vunpack.c.h.b16 %v977
          %v998 = vunpack.c.l.b16 %v978
          %v999 = vunpack.c.h.b16 %v978
          %v1000 = vunpack.c.l.b16 %v979
          %v1001 = vunpack.c.h.b16 %v979
          %v1002 = vunpack.c.l.b16 %v980
          %v1003 = vunpack.c.h.b16 %v980
          %v1004 = vunpack.c.l.b16 %v981
          %v1005 = vunpack.c.h.b16 %v981
          %v1006 = vpack.c.b16 %v990, %v990
          %v1007 = vpack.c.b16 %v991, %v991
          %v1008 = vpack.c.b16 %v992, %v992
          %v1009 = vpack.c.b16 %v993, %v993
          %v1010 = vpack.c.b16 %v994, %v994
          %v1011 = vpack.c.b16 %v995, %v995
          %v1012 = vpack.c.b16 %v996, %v996
          %v1013 = vpack.c.b16 %v997, %v997
          %v1014 = vpack.c.b16 %v998, %v998
          %v1015 = vpack.c.b16 %v999, %v999
          %v1016 = vpack.c.b16 %v1000, %v1000
          %v1017 = vpack.c.b16 %v1001, %v1001
          %v1018 = vpack.c.b16 %v1002, %v1002
          %v1019 = vpack.c.b16 %v1003, %v1003
          %v1020 = vpack.c.b16 %v1004, %v1004
          %v1021 = vpack.c.b16 %v1005, %v1005
          %1038 = vst [vmem:[%s371] sm:$0xf] %v1006
          %1039 = vst [vmem:[%s371 + $0x4] sm:$0xf] %v1007
          %1040 = vst [vmem:[%s371 + $0x8] sm:$0xf] %v1008
          %1041 = vst [vmem:[%s371 + $0xc] sm:$0xf] %v1009
          %1042 = vst [vmem:[%s371 + $0x10] sm:$0xf] %v1010
          %1043 = vst [vmem:[%s371 + $0x14] sm:$0xf] %v1011
          %1044 = vst [vmem:[%s371 + $0x18] sm:$0xf] %v1012
          %1045 = vst [vmem:[%s371 + $0x1c] sm:$0xf] %v1013
          %1046 = vst [vmem:[%s371 + $0x20] sm:$0xf] %v1014
          %1047 = vst [vmem:[%s371 + $0x24] sm:$0xf] %v1015
          %1048 = vst [vmem:[%s371 + $0x28] sm:$0xf] %v1016
          %1049 = vst [vmem:[%s371 + $0x2c] sm:$0xf] %v1017
          %1050 = vst [vmem:[%s371 + $0x30] sm:$0xf] %v1018
          %1051 = vst [vmem:[%s371 + $0x34] sm:$0xf] %v1019
          %1052 = vst [vmem:[%s371 + $0x38] sm:$0xf] %v1020
          %1053 = vst [vmem:[%s371 + $0x3c] sm:$0xf] %v1021
        $region94: #{tpu_custom_call.1} parent=73 // pred_fallthru
          _
        %s1054 = sand.u32 %s188, 1
        %s1055 = scalar_lea.sflag [#allocation9], %s1054
        %s1056 = sand.u32 %s188, 1
        %s1057 = smul.addr %s1056, 64
        %s1058 = scalar_lea.vmem [#allocation10], %s1057
        // Predicated region
        $region95: #{tpu_custom_call.1} parent=73 // pred_check
          %p1059 = pneg %p198
        $region96: #{tpu_custom_call.1} parent=73 // pred_check_branch
          %1061 = sbr.rel (%p1059) target = $region98
        $region97: #{tpu_custom_call.1} parent=73 // pred_region
          %s1062 = smul.u32 16, %s38
          %s1064 = ssub.s32 1024, 1024
          %1065 = vsyncadd %s1055, %s1064
          %s1066 = smul.addr %s1062, 64
          %s1067 = scalar_lea.hbm %s7, %s1066
          %s1068 = sshll.u32 %s1058, 4
          %s1069 = int_to_ptr.vmem [resolvable:$true] %s1068
          %1074 = dma.vmem_to_hbm [thread:$0]  %s1069, 1024, %s1067, %s1055, 64, 64, 4
        $region98: #{tpu_custom_call.1} parent=73 // pred_fallthru
          _
      $region74: #{tpu_custom_call.1} parent=5 // pred_fallthru
        _
      %p1075 = scmp.le.s32.totalorder 2, %s29
      // Predicated region
      $region99: #{tpu_custom_call.1} parent=5 // pred_check
        %p1076 = pneg %p1075
      $region100: #{tpu_custom_call.1} parent=5 // pred_check_branch
        %1078 = sbr.rel (%p1076) target = $region102
      $region101: #{tpu_custom_call.1} parent=5 // pred_region
        %s1079 = ssub.s32 %s29, 2
        // Predicated region
        $region103: #{tpu_custom_call.1} parent=101 // pred_check
          %p1080 = pneg %p204
        $region104: #{tpu_custom_call.1} parent=101 // pred_check_branch
          %1082 = sbr.rel (%p1080) target = $region106
        $region105: #{tpu_custom_call.1} parent=101 // pred_region
          %s1083 = sand.u32 %s189, 1
          %s1084 = scalar_lea.sflag [#allocation9], %s1083
          %s1085 = sand.u32 %s189, 1
          %s1086 = smul.addr %s1085, 64
          %s1087 = scalar_lea.vmem [#allocation10], %s1086
          %1088 = dma.done %s1084, 1024
        $region106: #{tpu_custom_call.1} parent=101 // pred_fallthru
          _
      $region102: #{tpu_custom_call.1} parent=5 // pred_fallthru
        _
    $region6: #{tpu_custom_call.1} parent=1 // loop_footer
      %s33 = sadd.s32 1, %s29
    $region7: #{tpu_custom_call.1} parent=1 // loop_footer_branch
      %28 = sbr.rel target = $region3
    $region8: #{tpu_custom_call.1} parent=1 // loop_exit
      _
    %1089 = vsyncpa [#allocation8], 1
    %s1090 = scalar_lea.sflag [#allocation8], 1
    %1091 = vsyncpa %s1090, 1
    %1092 = vsyncpa [#allocation9], 1
    %s1093 = scalar_lea.sflag [#allocation9], 1
    %1094 = vsyncpa %s1093, 1

</llo_original>
